<compile_context>
chip_gen: v5e
topology: v5e:2x2
jax: 0.10.0
libtpu: 0.0.40
codegen_flags: <defaults>
</compile_context>

<pallas_src>
import functools

import jax
import jax.numpy as jnp
from jax.experimental import pallas as pl
from jax.experimental.pallas import tpu as pltpu


_BATCH_TARGET_BYTES = 1 << 20       # pack batch elements until a single-pass step moves ~this much
_MIN_DIVISOR_TILE_BYTES = 1 << 20   # prefer an exact HW-divisor tile only if it is at least this big


def _round_up(x, m):
    return ((x + m - 1) // m) * m


def _tpu_budgets():
    """Generation-aware VMEM budgets: scoped-VMEM cap and spatial-tile byte target."""
    try:
        physical = int(pltpu.get_tpu_info().vmem_capacity_bytes)
    except Exception:
        physical = 64 << 20                      # unknown -> assume the small (v7x-like) part
    if physical >= (100 << 20):                  # v5e / v6e: 128 MiB physical VMEM
        return {"vmem_cap": 100 << 20, "tile_max_bytes": 6 << 20}
    # v7x-class: 64 MiB physical; leave headroom for Mosaic-internal scratch.
    return {"vmem_cap": 52 << 20, "tile_max_bytes": 4 << 20}


def _vmem_limit(nbytes, cap):
    return int(min(max(nbytes + (2 << 20), 32 << 20), cap))


def _pick_batch_block(n, per_image_io, per_image_need, cap, target=_BATCH_TARGET_BYTES):
    """Smallest divisor of n whose block reaches `target` bytes, subject to:
       * block fits the scoped-VMEM cap,
       * grid keeps >= 2 steps when n >= 2 (pipelining + megacore sharding)."""
    divisors = [d for d in range(1, n + 1) if n % d == 0]
    allowed = [d for d in divisors
               if (n == 1 or d <= n // 2)
               and d * per_image_need + (2 << 20) <= cap]
    if not allowed:
        allowed = [1]
    for d in allowed:
        if d * per_image_io >= target:
            return d
    return allowed[-1]


def _pick_hw_tile(hw, c, tile_max_bytes, itemsize):
    """Pick a lane-aligned HW tile.  Returns (T, hw_pad) with T % 128 == 0 and hw_pad % T == 0."""
    t_cap = max(128, (tile_max_bytes // (c * 4)) // 128 * 128)   # cap from f32 working copy
    t_cap = min(t_cap, _round_up(hw, 128))
    # Prefer an exact divisor (no pad copy) when it's big enough to amortize per-step overhead.
    best_div = None
    t = 128
    limit = min(hw, t_cap)
    while t <= limit:
        if hw % t == 0:
            best_div = t
        t += 128
    if best_div is not None and (c * best_div * itemsize >= _MIN_DIVISOR_TILE_BYTES
                                 or 2 * best_div > t_cap):
        return best_div, hw
    # Fallback: largest tile under the cap + zero padding (exact for sum(x^2); the padded
    # output lanes are sliced off in the wrapper).
    return t_cap, _round_up(hw, t_cap)


def _gac_kernel(params_ref, x_ref, o_ref, *, eps):
    """Single-pass path: block is (Nb, C, HW); whole per-image reduction in one step."""
    x = x_ref[...]                                             # (Nb, C, HW), io dtype
    xf = x.astype(jnp.float32)                                 # f32 only for the reduction
    p = params_ref[...]                                        # (C, 3) f32
    alpha = p[:, 0:1]
    gamma = p[:, 1:2]
    beta = p[:, 2:3]

    nl = jnp.sum(xf * xf, axis=-1, keepdims=True) + eps        # (Nb, C, 1)
    glo = jnp.sqrt(nl) * alpha
    nc = jnp.sqrt(jnp.mean(glo * glo, axis=1, keepdims=True) + eps)     # (Nb, 1, 1)
    scale = 1.0 + jnp.tanh(glo * (gamma / nc) + beta)          # (Nb, C, 1)  (== 1 + tanh)
    o_ref[...] = (x * scale.astype(x.dtype)).astype(o_ref.dtype)


def _gac_ssq_kernel(x_ref, ssq_ref):
    """Tiled pass 1: accumulate sum(x^2) per channel over HW tiles into the resident output."""
    k = pl.program_id(2)

    @pl.when(k == 0)
    def _():
        ssq_ref[...] = jnp.zeros_like(ssq_ref)

    x = x_ref[0].astype(jnp.float32)                           # (C, T)
    ssq_ref[0, 0] += jnp.sum(x * x, axis=-1, keepdims=True)    # (C, 1)


def _gac_apply_kernel(scale_ref, x_ref, o_ref):
    """Tiled pass 2: out = x * scale, streamed over HW tiles (no f32 tile copy)."""
    x = x_ref[...]                                             # (1, C, T), io dtype
    s = scale_ref[...].astype(x.dtype)                         # (1, C, 1)
    o_ref[...] = (x * s).astype(o_ref.dtype)


def gac_forward(x, alpha, gamma, beta, eps=1e-5, *, force_tiled=False, tile_max_bytes=None):
    """x: (N, C, H, W); alpha/gamma/beta: (1, C, 1, 1) (PyTorch param shape)."""
    N, C, H, W = x.shape
    HW = H * W
    xr = x.reshape(N, C, HW)
    itemsize = x.dtype.itemsize

    budgets = _tpu_budgets()
    cap = budgets["vmem_cap"]
    tile_max = tile_max_bytes if tile_max_bytes is not None else budgets["tile_max_bytes"]

    per_image_io = C * HW * itemsize
    per_image_f32 = C * HW * 4
    # dbl-buffered in + dbl-buffered out + f32 working copies for the reduction
    per_image_need = 4 * per_image_io + 2 * per_image_f32

    if (not force_tiled) and per_image_need + (2 << 20) <= cap:
        # ---------------- single-pass path (2x HBM traffic) ----------------
        params = jnp.concatenate(
            [alpha.reshape(C, 1), gamma.reshape(C, 1), beta.reshape(C, 1)],
            axis=1).astype(jnp.float32)                        # (C, 3)
        nb = _pick_batch_block(N, per_image_io, per_image_need, cap)
        out = pl.pallas_call(
            functools.partial(_gac_kernel, eps=eps),
            out_shape=jax.ShapeDtypeStruct((N, C, HW), x.dtype),
            grid_spec=pltpu.PrefetchScalarGridSpec(
                num_scalar_prefetch=0,
                grid=(N // nb,),
                in_specs=[
                    pl.BlockSpec((C, 3), lambda i: (0, 0)),            # packed alpha/gamma/beta
                    pl.BlockSpec((nb, C, HW), lambda i: (i, 0, 0)),    # x
                ],
                out_specs=pl.BlockSpec((nb, C, HW), lambda i: (i, 0, 0)),
            ),
            compiler_params=pltpu.CompilerParams(
                dimension_semantics=("parallel",),
                vmem_limit_bytes=_vmem_limit(nb * per_image_need, cap)),
        )(params, xr)
        return out.reshape(N, C, H, W)

    # ---------------- tiled two-pass path (large images) ----------------
    T, hw_pad = _pick_hw_tile(HW, C, tile_max, itemsize)
    xr_t = xr if hw_pad == HW else jnp.pad(xr, ((0, 0), (0, 0), (0, hw_pad - HW)))
    n_tiles = hw_pad // T

    # Split the spatial reduction across a "parallel" axis when the batch alone can't feed
    # both v7x TensorCores (N odd, e.g. single-image inference).  Harmless on 1-TC chips.
    splits = 2 if (N % 2 == 1 and n_tiles % 2 == 0 and n_tiles >= 2) else 1
    kps = n_tiles // splits

    blk_io = C * T * itemsize
    blk_f32 = C * T * 4

    # Pass 1: per-(image, split) partial sum of squares, accumulated in the resident out block.
    ssq = pl.pallas_call(
        _gac_ssq_kernel,
        out_shape=jax.ShapeDtypeStruct((N, splits, C, 1), jnp.float32),
        grid_spec=pltpu.PrefetchScalarGridSpec(
            num_scalar_prefetch=0,
            grid=(N, splits, kps),
            in_specs=[pl.BlockSpec((1, C, T), lambda n, s, k: (n, 0, s * kps + k))],
            out_specs=pl.BlockSpec((1, 1, C, 1), lambda n, s, k: (n, s, 0, 0)),
        ),
        compiler_params=pltpu.CompilerParams(
            dimension_semantics=("parallel", "parallel", "arbitrary"),
            vmem_limit_bytes=_vmem_limit(2 * blk_io + 2 * blk_f32, cap)),
    )(xr_t)

    # Tiny combine + calibration scale in plain JAX: (N, C, 1) elements only.
    a = alpha.reshape(1, C, 1).astype(jnp.float32)
    g = gamma.reshape(1, C, 1).astype(jnp.float32)
    b = beta.reshape(1, C, 1).astype(jnp.float32)
    nl = jnp.sum(ssq, axis=1) + eps                            # (N, C, 1)
    glo = jnp.sqrt(nl) * a
    nc = jnp.sqrt(jnp.mean(glo * glo, axis=1, keepdims=True) + eps)
    scale = 1.0 + jnp.tanh(glo * (g / nc) + b)                 # (N, C, 1) f32

    # Pass 2: elementwise apply; both grid axes parallel (feeds both v7x TensorCores).
    out = pl.pallas_call(
        _gac_apply_kernel,
        out_shape=jax.ShapeDtypeStruct((N, C, hw_pad), x.dtype),
        grid_spec=pltpu.PrefetchScalarGridSpec(
            num_scalar_prefetch=0,
            grid=(N, n_tiles),
            in_specs=[
                pl.BlockSpec((1, C, 1), lambda n, k: (n, 0, 0)),
                pl.BlockSpec((1, C, T), lambda n, k: (n, 0, k)),
            ],
            out_specs=pl.BlockSpec((1, C, T), lambda n, k: (n, 0, k)),
        ),
        compiler_params=pltpu.CompilerParams(
            dimension_semantics=("parallel", "parallel"),
            vmem_limit_bytes=_vmem_limit(4 * blk_io + blk_f32, cap)),
    )(scale, xr_t)

    if hw_pad != HW:
        out = out[:, :, :HW]
    return out.reshape(N, C, H, W)


def gac_reference(x, alpha, gamma, beta, eps=1e-5):
    """Plain-JAX reference mirroring the PyTorch forward exactly."""
    nl = jnp.sum(x ** 2, axis=(2, 3), keepdims=True) + eps
    glo = jnp.sqrt(nl) * alpha
    nc = jnp.sqrt(jnp.mean(glo ** 2, axis=1, keepdims=True) + eps)
    cal = gamma / nc
    return x * 1.0 + x * jnp.tanh(glo * cal + beta)


if __name__ == "__main__":
    key = jax.random.PRNGKey(0)
    k1, k2, k3, k4, k5, k6 = jax.random.split(key, 6)

    # --- case 1: small feature map -> single-pass path, grid kept at >= 2 steps ---
    N, C, H, W = 2, 4, 16, 16
    x = jax.random.normal(k1, (N, C, H, W), dtype=jnp.float32)
    alpha = 1.0 + 0.1 * jax.random.normal(k2, (1, C, 1, 1), dtype=jnp.float32)
    gamma = 0.1 * jax.random.normal(k3, (1, C, 1, 1), dtype=jnp.float32)
    beta = 0.1 * jax.random.normal(k4, (1, C, 1, 1), dtype=jnp.float32)

    out = jax.block_until_ready(gac_forward(x, alpha, gamma, beta))
    ref = gac_reference(x, alpha, gamma, beta)
    assert out.shape == (N, C, H, W)
    assert jnp.allclose(out, ref, atol=1e-5, rtol=1e-5), "single-pass mismatch vs reference"

    # --- case 2: force the tiled two-pass path with the split (2-way) spatial reduction ---
    N2, C2, H2, W2 = 1, 8, 16, 32          # HW = 512 -> 4 tiles of 128, splits=2
    x2 = jax.random.normal(k5, (N2, C2, H2, W2), dtype=jnp.float32)
    a2 = 1.0 + 0.1 * jax.random.normal(k2, (1, C2, 1, 1), dtype=jnp.float32)
    g2 = 0.1 * jax.random.normal(k3, (1, C2, 1, 1), dtype=jnp.float32)
    b2 = 0.1 * jax.random.normal(k4, (1, C2, 1, 1), dtype=jnp.float32)
    out2 = jax.block_until_ready(
        gac_forward(x2, a2, g2, b2, force_tiled=True, tile_max_bytes=C2 * 128 * 4))
    ref2 = gac_reference(x2, a2, g2, b2)
    assert out2.shape == (N2, C2, H2, W2)
    assert jnp.allclose(out2, ref2, atol=1e-5, rtol=1e-5), "tiled-path mismatch vs reference"

    # --- case 3: force the tiled path with HW not divisible by 128 (zero-padded tail) ---
    N3, C3, H3, W3 = 1, 8, 16, 17          # HW = 272 -> padded to 384, 3 tiles of 128
    x3 = jax.random.normal(k6, (N3, C3, H3, W3), dtype=jnp.float32)
    a3 = 1.0 + 0.1 * jax.random.normal(k2, (1, C3, 1, 1), dtype=jnp.float32)
    g3 = 0.1 * jax.random.normal(k3, (1, C3, 1, 1), dtype=jnp.float32)
    b3 = 0.1 * jax.random.normal(k4, (1, C3, 1, 1), dtype=jnp.float32)
    out3 = jax.block_until_ready(
        gac_forward(x3, a3, g3, b3, force_tiled=True, tile_max_bytes=C3 * 128 * 4))
    ref3 = gac_reference(x3, a3, g3, b3)
    assert out3.shape == (N3, C3, H3, W3)
    assert jnp.allclose(out3, ref3, atol=1e-5, rtol=1e-5), "padded-tail mismatch vs reference"

    print("KERNEL_OK")
</pallas_src>

<mosaic_0001>
module attributes {stable_mosaic.version = 11 : i64} {
  func.func @_gac_kernel(%arg0: i32, %arg1: memref<4x3xf32, #tpu.memory_space<vmem>>, %arg2: memref<1x4x256xf32, #tpu.memory_space<vmem>>, %arg3: memref<1x4x256xf32, #tpu.memory_space<vmem>>) attributes {dimension_semantics = [#tpu.dimension_semantics<parallel>], iteration_bounds = array<i64: 2>, scalar_prefetch = 0 : i64, scratch_operands = 0 : i64, tpu.core_type = #tpu.core_type<tc>, window_params = [{pipeline_mode = #tpu.pipeline_mode<synchronous>, transform_indices = @transform_0, window_bounds = array<i64: 4, 3>}, {transform_indices = @transform_1, window_bounds = array<i64: 1, 4, 256>}, {transform_indices = @transform_2, window_bounds = array<i64: 1, 4, 256>}]} {
    %c0 = arith.constant 0 : index
    %c0_0 = arith.constant 0 : index
    %c0_1 = arith.constant 0 : index
    %0 = vector.load %arg2[%c0, %c0_0, %c0_1] : memref<1x4x256xf32, #tpu.memory_space<vmem>>, vector<1x4x256xf32>
    %c0_2 = arith.constant 0 : index
    %c0_3 = arith.constant 0 : index
    %1 = vector.load %arg1[%c0_2, %c0_3] : memref<4x3xf32, #tpu.memory_space<vmem>>, vector<4x3xf32>
    %2 = vector.extract_strided_slice %1 {offsets = [0, 0], sizes = [4, 1], strides = [1, 1]} : vector<4x3xf32> to vector<4x1xf32>
    %3 = vector.extract_strided_slice %1 {offsets = [0, 1], sizes = [4, 1], strides = [1, 1]} : vector<4x3xf32> to vector<4x1xf32>
    %4 = vector.extract_strided_slice %1 {offsets = [0, 2], sizes = [4, 1], strides = [1, 1]} : vector<4x3xf32> to vector<4x1xf32>
    %5 = arith.mulf %0, %0 : vector<1x4x256xf32>
    %cst = arith.constant dense<0.000000e+00> : vector<1x4xf32>
    %6 = vector.multi_reduction <add>, %5, %cst [2] : vector<1x4x256xf32> to vector<1x4xf32>
    %7 = vector.shape_cast %6 : vector<1x4xf32> to vector<1x4x1xf32>
    %cst_4 = arith.constant 9.99999974E-6 : f32
    %8 = vector.broadcast %cst_4 : f32 to vector<1x4x1xf32>
    %9 = arith.addf %7, %8 : vector<1x4x1xf32>
    %10 = math.sqrt %9 : vector<1x4x1xf32>
    %11 = vector.shape_cast %2 : vector<4x1xf32> to vector<1x4x1xf32>
    %12 = arith.mulf %10, %11 : vector<1x4x1xf32>
    %13 = arith.mulf %12, %12 : vector<1x4x1xf32>
    %cst_5 = arith.constant dense<0.000000e+00> : vector<1x1xf32>
    %14 = vector.multi_reduction <add>, %13, %cst_5 [1] : vector<1x4x1xf32> to vector<1x1xf32>
    %15 = vector.shape_cast %14 : vector<1x1xf32> to vector<1x1x1xf32>
    %cst_6 = arith.constant 4.000000e+00 : f32
    %16 = vector.broadcast %cst_6 : f32 to vector<1x1x1xf32>
    %17 = arith.divf %15, %16 : vector<1x1x1xf32>
    %cst_7 = arith.constant 9.99999974E-6 : f32
    %18 = vector.broadcast %cst_7 : f32 to vector<1x1x1xf32>
    %19 = arith.addf %17, %18 : vector<1x1x1xf32>
    %20 = math.sqrt %19 : vector<1x1x1xf32>
    %21 = vector.shape_cast %3 : vector<4x1xf32> to vector<1x4x1xf32>
    %22 = vector.broadcast %20 : vector<1x1x1xf32> to vector<1x4x1xf32>
    %23 = arith.divf %21, %22 : vector<1x4x1xf32>
    %24 = arith.mulf %12, %23 : vector<1x4x1xf32>
    %25 = vector.shape_cast %4 : vector<4x1xf32> to vector<1x4x1xf32>
    %26 = arith.addf %24, %25 : vector<1x4x1xf32>
    %27 = math.tanh %26 : vector<1x4x1xf32>
    %cst_8 = arith.constant 1.000000e+00 : f32
    %28 = vector.broadcast %cst_8 : f32 to vector<1x4x1xf32>
    %29 = arith.addf %28, %27 : vector<1x4x1xf32>
    %30 = vector.broadcast %29 : vector<1x4x1xf32> to vector<1x4x256xf32>
    %31 = arith.mulf %0, %30 : vector<1x4x256xf32>
    %c0_9 = arith.constant 0 : index
    %c0_10 = arith.constant 0 : index
    %c0_11 = arith.constant 0 : index
    %32 = vector.load %arg3[%c0_9, %c0_10, %c0_11] : memref<1x4x256xf32, #tpu.memory_space<vmem>>, vector<1x4x256xf32>
    tpu.vector_store %arg3[%c0_9, %c0_10, %c0_11], %31 {strides = array<i32>} : memref<1x4x256xf32, #tpu.memory_space<vmem>>, vector<1x4x256xf32>,
    return
  }
  func.func @transform_0(%arg0: i32) -> (i32, i32) {
    %c0_i32 = arith.constant 0 : i32
    %c0_i32_0 = arith.constant 0 : i32
    %c0_i32_1 = arith.constant 0 : i32
    return %c0_i32, %c0_i32_0 : i32, i32
  }
  func.func @transform_1(%arg0: i32) -> (i32, i32, i32) {
    %c0_i32 = arith.constant 0 : i32
    %c0_i32_0 = arith.constant 0 : i32
    %c0_i32_1 = arith.constant 0 : i32
    return %arg0, %c0_i32, %c0_i32_0 : i32, i32, i32
  }
  func.func @transform_2(%arg0: i32) -> (i32, i32, i32) {
    %c0_i32 = arith.constant 0 : i32
    %c0_i32_0 = arith.constant 0 : i32
    %c0_i32_1 = arith.constant 0 : i32
    return %arg0, %c0_i32, %c0_i32_0 : i32, i32, i32
  }
}

</mosaic_0001>

<llo_original>
// kernel: tpu_custom_call.1
$region0: #{tpu_custom_call.1}
  #allocation0 [shape = 'u32[]', space=smem, size = 0x4, offset = 0x4, fixed_abs, tag = 'smem constant byte address 0x4 - core index']
  #allocation1 [shape = 'u32[72,128]{1,0:T(1,128)}', space=vmem, size = 0x9000, scoped, tag = 'internal scratch']
  %s0 = inlined_call_operand.hbm [shape: f32[4,3], index: 0, kind: input, shape index: {}]
  %s1 = inlined_call_operand.hbm [shape: f32[2,4,256], index: 1, kind: input, shape index: {}]
  %s2 = inlined_call_operand.hbm [shape: f32[2,4,256], index: 2, kind: output, shape index: {}]
  %s3 = sld [smem:[#allocation0]]
  $region49: #{tpu_custom_call.1} parent=0
    _
  %s5 = ssub.s32 1, %s3
  %s6 = scalar_select 0, %s5, %s3
  $region1: #{tpu_custom_call.1} parent=0
    #allocation2 [shape = 'u8[2048]{0}', space=vmem, size = 0x800, scoped, tag = 'input window, operand 0, single buffered']
    #allocation3 [shape = 's32[2]{0}', space=sflag, size = 0x8, scoped, tag = 'scoped memory for tpu_custom_call.1']
    #allocation4 [shape = 's32[2]{0}', space=sflag, size = 0x8, scoped, tag = 'scoped memory for tpu_custom_call.1']
    #allocation5 [shape = 'u8[8192]{0}', space=vmem, size = 0x2000, scoped, tag = 'input window, operand 1']
    #allocation6 [shape = 's32[2]{0}', space=sflag, size = 0x8, scoped, tag = 'scoped memory for tpu_custom_call.1']
    #allocation7 [shape = 'u8[8192]{0}', space=vmem, size = 0x2000, scoped, tag = 'output window, operand 0']
    %7 = vsyncpa [#allocation3], 0
    %8 = vsyncpa [#allocation6], 0
    %s9 = scalar_lea.sflag [#allocation6], 1
    %10 = vsyncpa %s9, 0
    %11 = vsyncpa [#allocation4], 0
    %s12 = scalar_lea.sflag [#allocation4], 1
    %13 = vsyncpa %s12, 0
    loop: start=0, step=1, limit=4
    $region2: #{tpu_custom_call.1} parent=1 // loop_pre_header
      _
    $region3: #{tpu_custom_call.1} parent=1 // loop_header
      %s15 = sphi 0, %s19
      %p16 = scmp.ge.s32.totalorder %s15, 4
      %s23 = sphi 0, %s23
      %s25 = sphi 0, %s23
      %s26 = sphi 0, %s25
      %s40 = sphi 0, %s26
      %s46 = sphi 0, %s48
      %s49 = sphi 0, %s46
      %s50 = sphi 0, %s49
      %s66 = sphi 0, %s50
      %s72 = sphi 0, %s74
      %s75 = sphi 0, %s72
      %s76 = sphi 0, %s75
      %s92 = sphi 0, %s76
    $region4: #{tpu_custom_call.1} parent=1 // loop_header_branch
      %18 = sbr.rel (%p16) target = $region8
    $region5: #{tpu_custom_call.1} parent=1 // loop_body
      %s20 = ssub.s32 %s15, 1
      %s21 = ssub.s32 %s15, 2
      %s22 = sadd.s32 %s15, 1
      %s24 = sadd.s32 %s23, 1
      %p27 = scmp.eq.s32.totalorder %s15, 1
      %p28 = scmp.ne.s32.totalorder %s23, %s25
      %p29 = scmp.eq.s32.totalorder %s15, 0
      %p30 = por %p28, %p29
      %p31 = scmp.ne.s32.totalorder %s23, %s25
      %p32 = scmp.eq.s32.totalorder %s20, 1
      %p33 = por %p31, %p32
      %p34 = scmp.ne.s32.totalorder %s25, %s26
      %p35 = scmp.eq.s32.totalorder %s20, 0
      %p36 = por %p34, %p35
      %p37 = scmp.ne.s32.totalorder %s25, %s26
      %p38 = scmp.eq.s32.totalorder %s21, 1
      %p39 = por %p37, %p38
      %p41 = scmp.ne.s32.totalorder %s26, %s40
      %p42 = scmp.eq.s32.totalorder %s21, 0
      %p43 = por %p41, %p42
      %s44 = ssub.s32 %s15, %s22
      %p45 = scmp.eq.s32.totalorder %s44, 0
      %s47 = sadd.s32 %s46, 1
      %s48 = scalar_select %p45, %s46, %s47
      %p51 = pneg %p45
      %p52 = scmp.eq.s32.totalorder %s15, 1
      %p53 = por %p51, %p52
      %p54 = scmp.ne.s32.totalorder %s46, %s49
      %p55 = scmp.eq.s32.totalorder %s15, 0
      %p56 = por %p54, %p55
      %p57 = scmp.ne.s32.totalorder %s46, %s49
      %p58 = scmp.eq.s32.totalorder %s20, 1
      %p59 = por %p57, %p58
      %p60 = scmp.ne.s32.totalorder %s49, %s50
      %p61 = scmp.eq.s32.totalorder %s20, 0
      %p62 = por %p60, %p61
      %p63 = scmp.ne.s32.totalorder %s49, %s50
      %p64 = scmp.eq.s32.totalorder %s21, 1
      %p65 = por %p63, %p64
      %p67 = scmp.ne.s32.totalorder %s50, %s66
      %p68 = scmp.eq.s32.totalorder %s21, 0
      %p69 = por %p67, %p68
      %s70 = ssub.s32 %s15, %s22
      %p71 = scmp.eq.s32.totalorder %s70, 0
      %s73 = sadd.s32 %s72, 1
      %s74 = scalar_select %p71, %s72, %s73
      %p77 = pneg %p71
      %p78 = scmp.eq.s32.totalorder %s15, 1
      %p79 = por %p77, %p78
      %p80 = scmp.ne.s32.totalorder %s72, %s75
      %p81 = scmp.eq.s32.totalorder %s15, 0
      %p82 = por %p80, %p81
      %p83 = scmp.ne.s32.totalorder %s72, %s75
      %p84 = scmp.eq.s32.totalorder %s20, 1
      %p85 = por %p83, %p84
      %p86 = scmp.ne.s32.totalorder %s75, %s76
      %p87 = scmp.eq.s32.totalorder %s20, 0
      %p88 = por %p86, %p87
      %p89 = scmp.ne.s32.totalorder %s75, %s76
      %p90 = scmp.eq.s32.totalorder %s21, 1
      %p91 = por %p89, %p90
      %p93 = scmp.ne.s32.totalorder %s76, %s92
      %p94 = scmp.eq.s32.totalorder %s21, 0
      %p95 = por %p93, %p94
      %p96 = scmp.le.s32.totalorder 1, %s15
      %p97 = scmp.lt.s32.totalorder %s15, 3
      %p98 = pnand %p96, %p97
      %p99 = pneg %p98
      // Predicated region
      $region9: #{tpu_custom_call.1} parent=5 // pred_check
        _
      $region10: #{tpu_custom_call.1} parent=5 // pred_check_branch
        %101 = sbr.rel (%p98) target = $region12
      $region11: #{tpu_custom_call.1} parent=5 // pred_region
        %s102 = ssub.s32 %s15, 1
        // Predicated region
        $region13: #{tpu_custom_call.1} parent=11 // pred_check
          %p103 = pneg %p36
        $region14: #{tpu_custom_call.1} parent=11 // pred_check_branch
          %105 = sbr.rel (%p103) target = $region16
        $region15: #{tpu_custom_call.1} parent=11 // pred_region
          %107 = vsyncadd [#allocation3], 0
          %s109 = sshll.u32 %s0, 4
          %s110 = int_to_ptr.hbm [resolvable:$true] %s109
          %s111 = sshll.u32 [#allocation2], 4
          %s112 = int_to_ptr.vmem [resolvable:$true] %s111
          %114 = dma.hbm_to_vmem [thread:$0]  %s110, 64, %s112, [#allocation3]
        $region16: #{tpu_custom_call.1} parent=11 // pred_fallthru
          _
      $region12: #{tpu_custom_call.1} parent=5 // pred_fallthru
        _
      %p115 = scmp.lt.s32.totalorder %s15, 2
      // Predicated region
      $region17: #{tpu_custom_call.1} parent=5 // pred_check
        %p116 = pneg %p115
      $region18: #{tpu_custom_call.1} parent=5 // pred_check_branch
        %118 = sbr.rel (%p116) target = $region20
      $region19: #{tpu_custom_call.1} parent=5 // pred_region
        // Predicated region
        $region21: #{tpu_custom_call.1} parent=19 // pred_check
          %p119 = pneg %p56
        $region22: #{tpu_custom_call.1} parent=19 // pred_check_branch
          %121 = sbr.rel (%p119) target = $region24
        $region23: #{tpu_custom_call.1} parent=19 // pred_region
          %s122 = sand.u32 %s46, 1
          %s123 = scalar_lea.sflag [#allocation6], %s122
          %s124 = sand.u32 %s46, 1
          %s125 = smul.addr %s124, 8
          %s126 = scalar_lea.vmem [#allocation5], %s125
          %128 = vsyncadd %s123, 0
          %s129 = smul.addr %s15, 2
          %s130 = smul.addr %s129, 4
          %s131 = scalar_lea.hbm %s1, %s130
          %s133 = sshll.u32 %s131, 4
          %s134 = int_to_ptr.hbm [resolvable:$true] %s133
          %s135 = sshll.u32 %s126, 4
          %s136 = int_to_ptr.vmem [resolvable:$true] %s135
          %138 = dma.hbm_to_vmem [thread:$0]  %s134, 128, %s136, %s123
        $region24: #{tpu_custom_call.1} parent=19 // pred_fallthru
          _
      $region20: #{tpu_custom_call.1} parent=5 // pred_fallthru
        _
      %p139 = scmp.le.s32.totalorder 1, %s15
      %p140 = scmp.lt.s32.totalorder %s15, 3
      %p141 = pnand %p139, %p140
      %p142 = pneg %p141
      // Predicated region
      $region25: #{tpu_custom_call.1} parent=5 // pred_check
        _
      $region26: #{tpu_custom_call.1} parent=5 // pred_check_branch
        %144 = sbr.rel (%p141) target = $region28
      $region27: #{tpu_custom_call.1} parent=5 // pred_region
        %s145 = ssub.s32 %s15, 1
        // Predicated region
        $region29: #{tpu_custom_call.1} parent=27 // pred_check
          %p146 = pneg %p36
        $region30: #{tpu_custom_call.1} parent=27 // pred_check_branch
          %148 = sbr.rel (%p146) target = $region32
        $region31: #{tpu_custom_call.1} parent=27 // pred_region
          %150 = dma.done [#allocation3], 64
        $region32: #{tpu_custom_call.1} parent=27 // pred_fallthru
          _
        %s151 = sand.u32 %s49, 1
        %s152 = scalar_lea.sflag [#allocation6], %s151
        %s153 = sand.u32 %s49, 1
        %s154 = smul.addr %s153, 8
        %s155 = scalar_lea.vmem [#allocation5], %s154
        // Predicated region
        $region33: #{tpu_custom_call.1} parent=27 // pred_check
          %p156 = pneg %p62
        $region34: #{tpu_custom_call.1} parent=27 // pred_check_branch
          %158 = sbr.rel (%p156) target = $region36
        $region35: #{tpu_custom_call.1} parent=27 // pred_region
          %160 = dma.done %s152, 128
        $region36: #{tpu_custom_call.1} parent=27 // pred_fallthru
          _
        %p161 = pneg %p36
        %p162 = pneg %p33
        %s163 = sand.u32 %s49, 1
        %s164 = scalar_lea.sflag [#allocation6], %s163
        %s165 = sand.u32 %s49, 1
        %s166 = smul.addr %s165, 8
        %s167 = scalar_lea.vmem [#allocation5], %s166
        %p168 = pneg %p62
        %p169 = pneg %p59
        %p170 = pneg %p88
        %p171 = pneg %p85
        %s172 = sand.u32 %s75, 1
        %s173 = scalar_lea.sflag [#allocation4], %s172
        %s174 = sand.u32 %s75, 1
        %s175 = smul.addr %s174, 8
        %s176 = scalar_lea.vmem [#allocation7], %s175
        %v177 = vld [vmem:[%s155] sm:$0xff]
        %v178 = vld [vmem:[#allocation2] sm:$0xf]
        %v179 = vmul.f32 %v177, %v177
        %181 = vst [vmem:[#allocation1] ss:$2 sm:$0xff] %v179
        %v182 = vld.sshfl [vmem:[#allocation1] sm:$0xff pattern:$0x75316420]
        %v183 = vld.sshfl [vmem:[#allocation1 + $0x8] sm:$0xff pattern:$0x75316420]
        %vm186 = vcmask 1043456
        %v187 = vsel %vm186, %v182, 0.0
        %v188 = vsel %vm186, %v183, 0.0
        %v189 = vadd.f32 %v187, %v188
        %190 = vadd.xlane.f32.xlu0 %v189
        %v191 = vpop.xlane.xlu0 %190
        %v192 = vadd.f32 %v191, 1e-05
        %v193 = vrsqrt.pop %v192
        %v194 = vmul.f32 %v193, %v192
        %v195 = vmul.f32 %v194, %v193
        %v196 = vmul.f32 0.5, %v195
        %v197 = vsub.f32 1.5, %v196
        %v198 = vmul.f32 %v193, %v197
        %v199 = vmul.f32 %v192, %v198
        %vm200 = vcmp.eq.f32.partialorder %v192, inf
        %v201 = vsel %vm200, %v192, %v199
        %vm202 = vcmp.eq.f32.partialorder %v192, 0.0
        %v203 = vand.u32 %v192, 2147483648
        %v204 = vsel %vm202, %v203, %v201
        %v205 = vmul.f32 %v204, %v178
        %v206 = vmul.f32 %v205, %v205
        %vm207 = vcmask 3072
        %v208 = vsel %vm207, %v206, 0.0
        %v209 = vrot.slane %v208, 4
        %v210 = vadd.f32 %v208, %v209
        %v211 = vrot.slane %v210, 2
        %v212 = vadd.f32 %v210, %v211
        %v213 = vrot.slane %v212, 1
        %v214 = vadd.f32 %v212, %v213
        %v215 = vrcp.pop 4.0
        %v216 = vmul.f32 4.0, %v215
        %v217 = vsub.f32 1.0, %v216
        %v218 = vmul.f32 %v215, %v217
        %v219 = vadd.f32 %v215, %v218
        %vm220 = vweird.f32 %v215
        %v221 = vsel %vm220, %v215, %v219
        %v222 = vmul.f32 %v214, %v221
        %v223 = vadd.f32 %v222, 1e-05
        %v224 = vrsqrt.pop %v223
        %v225 = vmul.f32 %v224, %v223
        %v226 = vmul.f32 %v225, %v224
        %v227 = vmul.f32 0.5, %v226
        %v228 = vsub.f32 1.5, %v227
        %v229 = vmul.f32 %v224, %v228
        %v230 = vmul.f32 %v223, %v229
        %vm231 = vcmp.eq.f32.partialorder %v223, inf
        %v232 = vsel %vm231, %v223, %v230
        %vm233 = vcmp.eq.f32.partialorder %v223, 0.0
        %v234 = vand.u32 %v223, 2147483648
        %v235 = vsel %vm233, %v234, %v232
        %237 = vrot.lane.b32.xlu0 %v235, 1
        %v238 = vpop.permute.xlu0 %237
        %v240 = vrcp.pop %v238
        %v241 = vmul.f32 %v238, %v240
        %v242 = vsub.f32 1.0, %v241
        %v243 = vmul.f32 %v240, %v242
        %v244 = vadd.f32 %v240, %v243
        %vm245 = vweird.f32 %v238
        %vm246 = vweird.f32 %v240
        %vm247 = vmor %vm245, %vm246
        %v248 = vsel %vm247, %v240, %v244
        %v249 = vand.u32 2147483647, %v238
        %vm250 = vcmp.eq.f32.partialorder %v249, 8.507059e+37
        %v251 = vand.u32 %v238, 2147483648
        %v252 = vor.u32 1.1754944e-38, %v251
        %v253 = vsel %vm250, %v252, %v248
        %v254 = vmul.f32 %v178, %v253
        %256 = vrot.lane.b32.xlu0 %v254, 127
        %v257 = vpop.permute.xlu0 %256
        %v259 = vmul.f32 %v205, %v257
        %261 = vrot.lane.b32.xlu0 %v178, 126
        %v262 = vpop.permute.xlu0 %261
        %v264 = vadd.f32 %v259, %v262
        %v265 = vtanh.pop %v264
        %v266 = vadd.f32 %v265, 1.0
        %268 = vset.pattern.permute.xlu0 0
        %269 = vperm.xlu0 %268, %v266
        %v270 = vpop.permute.xlu0 %269
        %v272 = vunpack.c.l.s4 839922192
        %v273 = vunpack.c.0.s8 %v272
        %v274 = vperm.slane %v270, %v273
        %v276 = vmul.f32 %v177, %v274
        %277 = vst [vmem:[%s176] sm:$0xff] %v276
        %s278 = sand.u32 %s75, 1
        %s279 = scalar_lea.sflag [#allocation4], %s278
        %s280 = sand.u32 %s75, 1
        %s281 = smul.addr %s280, 8
        %s282 = scalar_lea.vmem [#allocation7], %s281
        // Predicated region
        $region37: #{tpu_custom_call.1} parent=27 // pred_check
          %p283 = pneg %p85
        $region38: #{tpu_custom_call.1} parent=27 // pred_check_branch
          %285 = sbr.rel (%p283) target = $region40
        $region39: #{tpu_custom_call.1} parent=27 // pred_region
          %287 = vsyncadd %s279, 0
          %s288 = smul.addr %s20, 2
          %s289 = smul.addr %s288, 4
          %s290 = scalar_lea.hbm %s2, %s289
          %s292 = sshll.u32 %s282, 4
          %s293 = int_to_ptr.vmem [resolvable:$true] %s292
          %s294 = sshll.u32 %s290, 4
          %s295 = int_to_ptr.hbm [resolvable:$true] %s294
          %297 = dma.vmem_to_hbm [thread:$0]  %s293, 128, %s295, %s279
        $region40: #{tpu_custom_call.1} parent=27 // pred_fallthru
          _
      $region28: #{tpu_custom_call.1} parent=5 // pred_fallthru
        _
      %p298 = scmp.le.s32.totalorder 2, %s15
      // Predicated region
      $region41: #{tpu_custom_call.1} parent=5 // pred_check
        %p299 = pneg %p298
      $region42: #{tpu_custom_call.1} parent=5 // pred_check_branch
        %301 = sbr.rel (%p299) target = $region44
      $region43: #{tpu_custom_call.1} parent=5 // pred_region
        %s302 = ssub.s32 %s15, 2
        // Predicated region
        $region45: #{tpu_custom_call.1} parent=43 // pred_check
          %p303 = pneg %p91
        $region46: #{tpu_custom_call.1} parent=43 // pred_check_branch
          %305 = sbr.rel (%p303) target = $region48
        $region47: #{tpu_custom_call.1} parent=43 // pred_region
          %s306 = sand.u32 %s76, 1
          %s307 = scalar_lea.sflag [#allocation4], %s306
          %s308 = sand.u32 %s76, 1
          %s309 = smul.addr %s308, 8
          %s310 = scalar_lea.vmem [#allocation7], %s309
          %312 = dma.done %s307, 128
        $region48: #{tpu_custom_call.1} parent=43 // pred_fallthru
          _
      $region44: #{tpu_custom_call.1} parent=5 // pred_fallthru
        _
    $region6: #{tpu_custom_call.1} parent=1 // loop_footer
      %s19 = sadd.s32 1, %s15
    $region7: #{tpu_custom_call.1} parent=1 // loop_footer_branch
      %14 = sbr.rel target = $region3
    $region8: #{tpu_custom_call.1} parent=1 // loop_exit
      _
    %313 = vsyncpa [#allocation3], 1
    %s314 = scalar_lea.sflag [#allocation3], 1
    %315 = vsyncpa %s314, 1
    %316 = vsyncpa [#allocation6], 1
    %s317 = scalar_lea.sflag [#allocation6], 1
    %318 = vsyncpa %s317, 1
    %319 = vsyncpa [#allocation4], 1
    %s320 = scalar_lea.sflag [#allocation4], 1
    %321 = vsyncpa %s320, 1

</llo_original>
